<compile_context>
chip_gen: v7x
topology: tpu7x:2x2x1
jax: 0.10.0
libtpu: 0.0.40
codegen_flags: <defaults>
</compile_context>

<pallas_src>
import functools

import jax
import jax.numpy as jnp
from jax import lax
from jax.experimental import pallas as pl
from jax.experimental.pallas import tpu as pltpu

LANES = 512                # lane-dense slab width (multiple of 128)
SUB = 8                    # sublane fold target for the f32 partial outputs
ROW_ALIGN = 32             # row granularity: keeps 1-byte mask blocks natively tiled
CHUNK = ROW_ALIGN * LANES  # prefix alignment in elements (16384)


def _masked_mse_kernel(yp_ref, yt_ref, m_ref, out_ref, *, valid_rows, guard_last):
    """Per block: out[0:8] = folded masked sum of squares, out[8:16] = mask count."""
    i = pl.program_id(0)
    rb, lanes = yp_ref.shape

    d = yp_ref[...].astype(jnp.float32) - yt_ref[...].astype(jnp.float32)
    m = m_ref[...]  # bool, used directly

    def fold_and_store(keep):
        sq = jnp.where(keep, d * d, 0.0)      # where (not *): garbage NaN/inf dies
        cnt = jnp.where(keep, 1.0, 0.0)
        # Fold rows down to 8 sublanes with pure VPU adds (no cross-lane XLU work,
        # no carried scalar accumulator -> grid axis can stay "parallel").
        out_ref[0:SUB, :] = jnp.sum(sq.reshape(rb // SUB, SUB, lanes), axis=0)
        out_ref[SUB:, :] = jnp.sum(cnt.reshape(rb // SUB, SUB, lanes), axis=0)

    if not guard_last:
        # rows % row_block == 0 (static): every block is fully valid, no guard at all.
        fold_and_store(m)
    else:
        last = pl.num_programs(0) - 1

        @pl.when(i != last)
        def _interior():
            fold_and_store(m)

        @pl.when(i == last)
        def _last():
            # Only the last block can contain rows past the true extent; kill them.
            row = lax.broadcasted_iota(jnp.int32, (rb, lanes), 0) + i * rb
            fold_and_store(jnp.logical_and(row < valid_rows, m))


def _block_config():
    """(max_row_block, vmem_limit_bytes) tuned per TPU generation."""
    try:
        kind = jax.devices()[0].device_kind.lower()
    except Exception:
        kind = ""
    if "v6" in kind:
        return 2048, 64 * 1024 * 1024   # 128 MiB physical VMEM -> plenty of headroom
    if "v7" in kind or "7x" in kind:
        return 2048, 48 * 1024 * 1024   # 64 MiB physical VMEM per TensorCore
    if "v5" in kind:
        return 1024, 64 * 1024 * 1024   # 128 MiB physical VMEM
    return 512, None                    # unknown chip: conservative defaults


def _masked_mse_partials(yp, yt, m):
    """Kernel path for a CHUNK-aligned flat prefix. Returns (sum_sq, count) scalars."""
    n = yp.shape[0]
    rows = n // LANES                   # multiple of ROW_ALIGN by construction
    yp2 = yp.reshape(rows, LANES)
    yt2 = yt.reshape(rows, LANES)
    m2 = m.reshape(rows, LANES)

    max_block, vmem_limit = _block_config()
    if 2 * ROW_ALIGN <= rows <= 2 * max_block:
        # Guarantee >= 2 grid steps so the "parallel" axis feeds both TCs on v7x.
        row_block = max(ROW_ALIGN, ((rows // 2) // ROW_ALIGN) * ROW_ALIGN)
    else:
        row_block = min(max_block, rows)
    num_blocks = pl.cdiv(rows, row_block)
    guard_last = (rows % row_block) != 0   # static: interior blocks skip the guard

    kernel = functools.partial(
        _masked_mse_kernel, valid_rows=rows, guard_last=guard_last
    )

    cp = dict(dimension_semantics=("parallel",))
    if vmem_limit is not None:
        cp["vmem_limit_bytes"] = vmem_limit

    out = pl.pallas_call(
        kernel,
        out_shape=jax.ShapeDtypeStruct((num_blocks * 2 * SUB, LANES), jnp.float32),
        grid_spec=pltpu.PrefetchScalarGridSpec(
            num_scalar_prefetch=0,
            grid=(num_blocks,),
            in_specs=[
                pl.BlockSpec((row_block, LANES), lambda i: (i, 0)),
                pl.BlockSpec((row_block, LANES), lambda i: (i, 0)),
                pl.BlockSpec((row_block, LANES), lambda i: (i, 0)),
            ],
            out_specs=pl.BlockSpec((2 * SUB, LANES), lambda i: (i, 0)),
        ),
        compiler_params=pltpu.CompilerParams(**cp),
    )(yp2, yt2, m2)

    out = out.reshape(num_blocks, 2, SUB, LANES)
    return jnp.sum(out[:, 0]), jnp.sum(out[:, 1])


def masked_mse_loss(y_pred, y_true, mask):
    """mean((y_pred[mask] - y_true[mask])**2); NaN for an all-false mask (torch parity)."""
    assert y_pred.shape == y_true.shape == mask.shape
    n = y_pred.size

    yp = jnp.ravel(y_pred)
    yt = jnp.ravel(y_true)
    m = jnp.ravel(mask)                 # stays bool: 1 B/elem, no conversion pass

    n_aligned = (n // CHUNK) * CHUNK

    sq_sum = jnp.float32(0.0)
    cnt_sum = jnp.float32(0.0)

    if n_aligned:                       # bulk: Pallas kernel on the aligned prefix
        s, c = _masked_mse_partials(yp[:n_aligned], yt[:n_aligned], m[:n_aligned])
        sq_sum += s
        cnt_sum += c

    if n_aligned < n:                   # tail (< CHUNK elems): one tiny fused jnp pass
        dt = yp[n_aligned:].astype(jnp.float32) - yt[n_aligned:].astype(jnp.float32)
        mt = m[n_aligned:]
        sq_sum += jnp.sum(jnp.where(mt, dt * dt, 0.0))
        cnt_sum += jnp.sum(mt.astype(jnp.float32))

    return sq_sum / cnt_sum


if __name__ == "__main__":
    loss_fn = jax.jit(masked_mse_loss)

    def ref_loss(yp, yt, m):
        return jnp.sum(jnp.where(m, (yp - yt) ** 2, 0.0)) / jnp.sum(
            m.astype(jnp.float32)
        )

    key = jax.random.PRNGKey(0)
    test_shapes = [
        (2, 8, 64, 64),    # 65536 elems: aligned -> kernel only, 2 parallel blocks
        (2, 5, 128, 64),   # 81920 elems: aligned, ragged last block -> pl.when guard
        (2, 4, 65, 64),    # 33280 elems: kernel prefix + small jnp tail
        (2, 4, 16, 16),    # 2048 elems: smaller than one chunk -> jnp-only path
    ]

    for idx, shape in enumerate(test_shapes):
        k1, k2, k3 = jax.random.split(jax.random.fold_in(key, idx), 3)
        y_pred = jax.random.normal(k1, shape, dtype=jnp.float32)
        y_true = jax.random.normal(k2, shape, dtype=jnp.float32)
        mask = jax.random.bernoulli(k3, p=0.5, shape=shape)

        loss = loss_fn(y_pred, y_true, mask)
        jax.block_until_ready(loss)

        ref = ref_loss(y_pred, y_true, mask)
        assert jnp.allclose(loss, ref, rtol=1e-5, atol=1e-6), (shape, loss, ref)

    print("KERNEL_OK")
</pallas_src>

<mosaic_0001>
module attributes {stable_mosaic.version = 11 : i64} {
  func.func @_masked_mse_kernel(%arg0: i32, %arg1: memref<64x512xf32, #tpu.memory_space<vmem>>, %arg2: memref<64x512xf32, #tpu.memory_space<vmem>>, %arg3: memref<64x512xi32, #tpu.memory_space<vmem>>, %arg4: memref<16x512xf32, #tpu.memory_space<vmem>>) attributes {dimension_semantics = [#tpu.dimension_semantics<parallel>], iteration_bounds = array<i64: 2>, scalar_prefetch = 0 : i64, scratch_operands = 0 : i64, tpu.core_type = #tpu.core_type<tc>, window_params = [{transform_indices = @transform_0, window_bounds = array<i64: 64, 512>}, {transform_indices = @transform_1, window_bounds = array<i64: 64, 512>}, {transform_indices = @transform_2, window_bounds = array<i64: 64, 512>}, {transform_indices = @transform_3, window_bounds = array<i64: 16, 512>}]} {
    %c0 = arith.constant 0 : index
    %c0_0 = arith.constant 0 : index
    %0 = vector.load %arg1[%c0, %c0_0] : memref<64x512xf32, #tpu.memory_space<vmem>>, vector<64x512xf32>
    %c0_1 = arith.constant 0 : index
    %c0_2 = arith.constant 0 : index
    %1 = vector.load %arg2[%c0_1, %c0_2] : memref<64x512xf32, #tpu.memory_space<vmem>>, vector<64x512xf32>
    %2 = arith.subf %0, %1 : vector<64x512xf32>
    %c0_3 = arith.constant 0 : index
    %c0_4 = arith.constant 0 : index
    %3 = vector.load %arg3[%c0_3, %c0_4] : memref<64x512xi32, #tpu.memory_space<vmem>>, vector<64x512xi32>
    %cst = arith.constant dense<0> : vector<64x512xi32>
    %4 = arith.cmpi ne, %3, %cst : vector<64x512xi32>
    %5 = arith.mulf %2, %2 : vector<64x512xf32>
    %cst_5 = arith.constant 0.000000e+00 : f32
    %6 = vector.broadcast %cst_5 : f32 to vector<64x512xf32>
    %7 = arith.select %4, %5, %6 : vector<64x512xi1>, vector<64x512xf32>
    %cst_6 = arith.constant 1.000000e+00 : f32
    %cst_7 = arith.constant 0.000000e+00 : f32
    %8 = vector.broadcast %cst_6 : f32 to vector<64x512xf32>
    %9 = vector.broadcast %cst_7 : f32 to vector<64x512xf32>
    %10 = arith.select %4, %8, %9 : vector<64x512xi1>, vector<64x512xf32>
    %11 = vector.shape_cast %7 : vector<64x512xf32> to vector<8x8x512xf32>
    %cst_8 = arith.constant dense<0.000000e+00> : vector<8x512xf32>
    %12 = vector.multi_reduction <add>, %11, %cst_8 [0] : vector<8x8x512xf32> to vector<8x512xf32>
    %c0_9 = arith.constant 0 : index
    %c0_10 = arith.constant 0 : index
    %13 = vector.load %arg4[%c0_9, %c0_10] : memref<16x512xf32, #tpu.memory_space<vmem>>, vector<8x512xf32>
    tpu.vector_store %arg4[%c0_9, %c0_10], %12 {strides = array<i32>} : memref<16x512xf32, #tpu.memory_space<vmem>>, vector<8x512xf32>,
    %14 = vector.shape_cast %10 : vector<64x512xf32> to vector<8x8x512xf32>
    %cst_11 = arith.constant dense<0.000000e+00> : vector<8x512xf32>
    %15 = vector.multi_reduction <add>, %14, %cst_11 [0] : vector<8x8x512xf32> to vector<8x512xf32>
    %c8 = arith.constant 8 : index
    %c0_12 = arith.constant 0 : index
    %16 = vector.load %arg4[%c8, %c0_12] : memref<16x512xf32, #tpu.memory_space<vmem>>, vector<8x512xf32>
    tpu.vector_store %arg4[%c8, %c0_12], %15 {strides = array<i32>} : memref<16x512xf32, #tpu.memory_space<vmem>>, vector<8x512xf32>,
    return
  }
  func.func @transform_0(%arg0: i32) -> (i32, i32) {
    %c0_i32 = arith.constant 0 : i32
    %c0_i32_0 = arith.constant 0 : i32
    return %arg0, %c0_i32 : i32, i32
  }
  func.func @transform_1(%arg0: i32) -> (i32, i32) {
    %c0_i32 = arith.constant 0 : i32
    %c0_i32_0 = arith.constant 0 : i32
    return %arg0, %c0_i32 : i32, i32
  }
  func.func @transform_2(%arg0: i32) -> (i32, i32) {
    %c0_i32 = arith.constant 0 : i32
    %c0_i32_0 = arith.constant 0 : i32
    return %arg0, %c0_i32 : i32, i32
  }
  func.func @transform_3(%arg0: i32) -> (i32, i32) {
    %c0_i32 = arith.constant 0 : i32
    %c0_i32_0 = arith.constant 0 : i32
    return %arg0, %c0_i32 : i32, i32
  }
}

</mosaic_0001>

<llo_original>
// kernel: masked_mse_loss.1
$region0: #{masked_mse_loss.1}
  #allocation0 [shape = 'u32[]', space=smem, size = 0x4, offset = 0x4, fixed_abs, tag = 'smem constant byte address 0x4 - core index']
  #allocation1 [shape = 'u32[144,128]{1,0:T(1,128)}', space=vmem, size = 0x12000, scoped, tag = 'internal scratch']
  %s0 = inlined_call_operand.vmem [shape: f32[128,512], index: 0, kind: input, shape index: {}]
  %s1 = inlined_call_operand.vmem [shape: f32[128,512], index: 1, kind: input, shape index: {}]
  %s2 = inlined_call_operand.vmem [shape: s32[128,512], index: 2, kind: input, shape index: {}]
  %s3 = inlined_call_operand.vmem [shape: f32[32,512], index: 3, kind: output, shape index: {}]
  %s4 = sld [smem:[#allocation0]]
  $region45: #{masked_mse_loss.1} parent=0
    _
  %s6 = ssub.s32 1, %s4
  %s7 = scalar_select 0, %s6, %s4
  loop: start=0, step=1, limit=4
  $region2: #{masked_mse_loss.1} parent=0 // loop_pre_header
    _
  $region3: #{masked_mse_loss.1} parent=0 // loop_header
    %s9 = sphi 0, %s13
    %p10 = scmp.ge.s32.totalorder %s9, 4
    %s19 = sphi 0, %s21
    %s22 = sphi 0, %s19
    %s23 = sphi 0, %s22
    %s39 = sphi 0, %s23
    %s45 = sphi 0, %s47
    %s48 = sphi 0, %s45
    %s49 = sphi 0, %s48
    %s65 = sphi 0, %s49
    %s71 = sphi 0, %s73
    %s74 = sphi 0, %s71
    %s75 = sphi 0, %s74
    %s91 = sphi 0, %s75
    %s97 = sphi 0, %s99
    %s100 = sphi 0, %s97
    %s101 = sphi 0, %s100
    %s117 = sphi 0, %s101
  $region4: #{masked_mse_loss.1} parent=0 // loop_header_branch
    %12 = sbr.rel (%p10) target = $region8
  $region5: #{masked_mse_loss.1} parent=0 // loop_body
    %s14 = ssub.s32 %s9, 1
    %s15 = ssub.s32 %s9, 2
    %s16 = sadd.s32 %s9, 1
    %s17 = ssub.s32 %s9, %s16
    %p18 = scmp.eq.s32.totalorder %s17, 0
    %s20 = sadd.s32 %s19, 1
    %s21 = scalar_select %p18, %s19, %s20
    %p24 = pneg %p18
    %p25 = scmp.eq.s32.totalorder %s9, 1
    %p26 = por %p24, %p25
    %p27 = scmp.ne.s32.totalorder %s19, %s22
    %p28 = scmp.eq.s32.totalorder %s9, 0
    %p29 = por %p27, %p28
    %p30 = scmp.ne.s32.totalorder %s19, %s22
    %p31 = scmp.eq.s32.totalorder %s14, 1
    %p32 = por %p30, %p31
    %p33 = scmp.ne.s32.totalorder %s22, %s23
    %p34 = scmp.eq.s32.totalorder %s14, 0
    %p35 = por %p33, %p34
    %p36 = scmp.ne.s32.totalorder %s22, %s23
    %p37 = scmp.eq.s32.totalorder %s15, 1
    %p38 = por %p36, %p37
    %p40 = scmp.ne.s32.totalorder %s23, %s39
    %p41 = scmp.eq.s32.totalorder %s15, 0
    %p42 = por %p40, %p41
    %s43 = ssub.s32 %s9, %s16
    %p44 = scmp.eq.s32.totalorder %s43, 0
    %s46 = sadd.s32 %s45, 1
    %s47 = scalar_select %p44, %s45, %s46
    %p50 = pneg %p44
    %p51 = scmp.eq.s32.totalorder %s9, 1
    %p52 = por %p50, %p51
    %p53 = scmp.ne.s32.totalorder %s45, %s48
    %p54 = scmp.eq.s32.totalorder %s9, 0
    %p55 = por %p53, %p54
    %p56 = scmp.ne.s32.totalorder %s45, %s48
    %p57 = scmp.eq.s32.totalorder %s14, 1
    %p58 = por %p56, %p57
    %p59 = scmp.ne.s32.totalorder %s48, %s49
    %p60 = scmp.eq.s32.totalorder %s14, 0
    %p61 = por %p59, %p60
    %p62 = scmp.ne.s32.totalorder %s48, %s49
    %p63 = scmp.eq.s32.totalorder %s15, 1
    %p64 = por %p62, %p63
    %p66 = scmp.ne.s32.totalorder %s49, %s65
    %p67 = scmp.eq.s32.totalorder %s15, 0
    %p68 = por %p66, %p67
    %s69 = ssub.s32 %s9, %s16
    %p70 = scmp.eq.s32.totalorder %s69, 0
    %s72 = sadd.s32 %s71, 1
    %s73 = scalar_select %p70, %s71, %s72
    %p76 = pneg %p70
    %p77 = scmp.eq.s32.totalorder %s9, 1
    %p78 = por %p76, %p77
    %p79 = scmp.ne.s32.totalorder %s71, %s74
    %p80 = scmp.eq.s32.totalorder %s9, 0
    %p81 = por %p79, %p80
    %p82 = scmp.ne.s32.totalorder %s71, %s74
    %p83 = scmp.eq.s32.totalorder %s14, 1
    %p84 = por %p82, %p83
    %p85 = scmp.ne.s32.totalorder %s74, %s75
    %p86 = scmp.eq.s32.totalorder %s14, 0
    %p87 = por %p85, %p86
    %p88 = scmp.ne.s32.totalorder %s74, %s75
    %p89 = scmp.eq.s32.totalorder %s15, 1
    %p90 = por %p88, %p89
    %p92 = scmp.ne.s32.totalorder %s75, %s91
    %p93 = scmp.eq.s32.totalorder %s15, 0
    %p94 = por %p92, %p93
    %s95 = ssub.s32 %s9, %s16
    %p96 = scmp.eq.s32.totalorder %s95, 0
    %s98 = sadd.s32 %s97, 1
    %s99 = scalar_select %p96, %s97, %s98
    %p102 = pneg %p96
    %p103 = scmp.eq.s32.totalorder %s9, 1
    %p104 = por %p102, %p103
    %p105 = scmp.ne.s32.totalorder %s97, %s100
    %p106 = scmp.eq.s32.totalorder %s9, 0
    %p107 = por %p105, %p106
    %p108 = scmp.ne.s32.totalorder %s97, %s100
    %p109 = scmp.eq.s32.totalorder %s14, 1
    %p110 = por %p108, %p109
    %p111 = scmp.ne.s32.totalorder %s100, %s101
    %p112 = scmp.eq.s32.totalorder %s14, 0
    %p113 = por %p111, %p112
    %p114 = scmp.ne.s32.totalorder %s100, %s101
    %p115 = scmp.eq.s32.totalorder %s15, 1
    %p116 = por %p114, %p115
    %p118 = scmp.ne.s32.totalorder %s101, %s117
    %p119 = scmp.eq.s32.totalorder %s15, 0
    %p120 = por %p118, %p119
    %p121 = scmp.le.s32.totalorder 1, %s9
    %p122 = scmp.lt.s32.totalorder %s9, 3
    %p123 = pnand %p121, %p122
    %p124 = pneg %p123
    // Predicated region
    $region9: #{masked_mse_loss.1} parent=5 // pred_check
      _
    $region10: #{masked_mse_loss.1} parent=5 // pred_check_branch
      %126 = sbr.rel (%p123) target = $region12
    $region11: #{masked_mse_loss.1} parent=5 // pred_region
      %s127 = ssub.s32 %s9, 1
    $region12: #{masked_mse_loss.1} parent=5 // pred_fallthru
      _
    %p128 = scmp.lt.s32.totalorder %s9, 2
    // Predicated region
    $region13: #{masked_mse_loss.1} parent=5 // pred_check
      %p129 = pneg %p128
    $region14: #{masked_mse_loss.1} parent=5 // pred_check_branch
      %131 = sbr.rel (%p129) target = $region16
    $region15: #{masked_mse_loss.1} parent=5 // pred_region
      // Predicated region
      $region17: #{masked_mse_loss.1} parent=15 // pred_check
        %p132 = pneg %p29
      $region18: #{masked_mse_loss.1} parent=15 // pred_check_branch
        %134 = sbr.rel (%p132) target = $region20
      $region19: #{masked_mse_loss.1} parent=15 // pred_region
        %s135 = smul.u32 8, %s9
        %p136 = scmp.lt.s32.totalorder %s135, 15
        %s137 = scalar_select %p136, %s135, 15
        %s138 = smul.addr %s137, 4
        %s139 = smul.addr %s138, 8
        %s140 = scalar_lea.vmem %s0, %s139
        %s141 = smul.u32 8, %s9
      $region20: #{masked_mse_loss.1} parent=15 // pred_fallthru
        _
      // Predicated region
      $region21: #{masked_mse_loss.1} parent=15 // pred_check
        %p142 = pneg %p55
      $region22: #{masked_mse_loss.1} parent=15 // pred_check_branch
        %144 = sbr.rel (%p142) target = $region24
      $region23: #{masked_mse_loss.1} parent=15 // pred_region
        %s145 = smul.u32 8, %s9
        %p146 = scmp.lt.s32.totalorder %s145, 15
        %s147 = scalar_select %p146, %s145, 15
        %s148 = smul.addr %s147, 4
        %s149 = smul.addr %s148, 8
        %s150 = scalar_lea.vmem %s1, %s149
        %s151 = smul.u32 8, %s9
      $region24: #{masked_mse_loss.1} parent=15 // pred_fallthru
        _
      // Predicated region
      $region25: #{masked_mse_loss.1} parent=15 // pred_check
        %p152 = pneg %p81
      $region26: #{masked_mse_loss.1} parent=15 // pred_check_branch
        %154 = sbr.rel (%p152) target = $region28
      $region27: #{masked_mse_loss.1} parent=15 // pred_region
        %s155 = smul.u32 8, %s9
        %p156 = scmp.lt.s32.totalorder %s155, 15
        %s157 = scalar_select %p156, %s155, 15
        %s158 = smul.addr %s157, 4
        %s159 = smul.addr %s158, 8
        %s160 = scalar_lea.vmem %s2, %s159
        %s161 = smul.u32 8, %s9
      $region28: #{masked_mse_loss.1} parent=15 // pred_fallthru
        _
    $region16: #{masked_mse_loss.1} parent=5 // pred_fallthru
      _
    %p162 = scmp.le.s32.totalorder 1, %s9
    %p163 = scmp.lt.s32.totalorder %s9, 3
    %p164 = pnand %p162, %p163
    %p165 = pneg %p164
    // Predicated region
    $region29: #{masked_mse_loss.1} parent=5 // pred_check
      _
    $region30: #{masked_mse_loss.1} parent=5 // pred_check_branch
      %167 = sbr.rel (%p164) target = $region32
    $region31: #{masked_mse_loss.1} parent=5 // pred_region
      %s168 = ssub.s32 %s9, 1
      %s169 = smul.u32 8, %s14
      %p170 = scmp.lt.s32.totalorder %s169, 15
      %s171 = scalar_select %p170, %s169, 15
      %s172 = smul.addr %s171, 4
      %s173 = smul.addr %s172, 8
      %s174 = scalar_lea.vmem %s0, %s173
      %p175 = pneg %p35
      %p176 = pneg %p32
      %s177 = smul.u32 8, %s14
      %p178 = scmp.lt.s32.totalorder %s177, 15
      %s179 = scalar_select %p178, %s177, 15
      %s180 = smul.addr %s179, 4
      %s181 = smul.addr %s180, 8
      %s182 = scalar_lea.vmem %s1, %s181
      %p183 = pneg %p61
      %p184 = pneg %p58
      %s185 = smul.u32 8, %s14
      %p186 = scmp.lt.s32.totalorder %s185, 15
      %s187 = scalar_select %p186, %s185, 15
      %s188 = smul.addr %s187, 4
      %s189 = smul.addr %s188, 8
      %s190 = scalar_lea.vmem %s2, %s189
      %p191 = pneg %p87
      %p192 = pneg %p84
      %p193 = pneg %p113
      %p194 = pneg %p110
      %s195 = smul.u32 2, %s14
      %p196 = scmp.lt.s32.totalorder %s195, 3
      %s197 = scalar_select %p196, %s195, 3
      %s198 = smul.addr %s197, 4
      %s199 = smul.addr %s198, 8
      %s200 = scalar_lea.vmem %s3, %s199
      %s201 = smul.u32 8, %s14
      %p202 = scmp.lt.s32.totalorder %s201, 15
      %s203 = scalar_select %p202, %s201, 15
      %s204 = smul.addr %s203, 4
      %s205 = smul.addr %s204, 8
      %s206 = scalar_lea.vmem %s0, %s205
      %s207 = smul.u32 8, %s14
      %s208 = smul.u32 8, %s14
      %p209 = scmp.lt.s32.totalorder %s208, 15
      %s210 = scalar_select %p209, %s208, 15
      %s211 = smul.addr %s210, 4
      %s212 = smul.addr %s211, 8
      %s213 = scalar_lea.vmem %s1, %s212
      %s214 = smul.u32 8, %s14
      %s215 = smul.u32 8, %s14
      %p216 = scmp.lt.s32.totalorder %s215, 15
      %s217 = scalar_select %p216, %s215, 15
      %s218 = smul.addr %s217, 4
      %s219 = smul.addr %s218, 8
      %s220 = scalar_lea.vmem %s2, %s219
      %s221 = smul.u32 8, %s14
      %s222 = smul.u32 2, %s14
      %p223 = scmp.lt.s32.totalorder %s222, 3
      %s224 = scalar_select %p223, %s222, 3
      %s225 = smul.addr %s224, 4
      %s226 = smul.addr %s225, 8
      %s227 = scalar_lea.vmem %s3, %s226
      %s228 = smul.u32 2, %s14
      %v229 = vld [vmem:[%s206] sm:$0xff]
      %v230 = vld [vmem:[%s206 + $0x8] sm:$0xff]
      %v231 = vld [vmem:[%s206 + $0x10] sm:$0xff]
      %v232 = vld [vmem:[%s206 + $0x18] sm:$0xff]
      %v233 = vld [vmem:[%s206 + $0x20] sm:$0xff]
      %v234 = vld [vmem:[%s206 + $0x28] sm:$0xff]
      %v235 = vld [vmem:[%s206 + $0x30] sm:$0xff]
      %v236 = vld [vmem:[%s206 + $0x38] sm:$0xff]
      %v237 = vld [vmem:[%s206 + $0x40] sm:$0xff]
      %v238 = vld [vmem:[%s206 + $0x48] sm:$0xff]
      %v239 = vld [vmem:[%s206 + $0x50] sm:$0xff]
      %v240 = vld [vmem:[%s206 + $0x58] sm:$0xff]
      %v241 = vld [vmem:[%s206 + $0x60] sm:$0xff]
      %v242 = vld [vmem:[%s206 + $0x68] sm:$0xff]
      %v243 = vld [vmem:[%s206 + $0x70] sm:$0xff]
      %v244 = vld [vmem:[%s206 + $0x78] sm:$0xff]
      %v245 = vld [vmem:[%s206 + $0x80] sm:$0xff]
      %v246 = vld [vmem:[%s206 + $0x88] sm:$0xff]
      %v247 = vld [vmem:[%s206 + $0x90] sm:$0xff]
      %v248 = vld [vmem:[%s206 + $0x98] sm:$0xff]
      %v249 = vld [vmem:[%s206 + $0xa0] sm:$0xff]
      %v250 = vld [vmem:[%s206 + $0xa8] sm:$0xff]
      %v251 = vld [vmem:[%s206 + $0xb0] sm:$0xff]
      %v252 = vld [vmem:[%s206 + $0xb8] sm:$0xff]
      %v253 = vld [vmem:[%s206 + $0xc0] sm:$0xff]
      %v254 = vld [vmem:[%s206 + $0xc8] sm:$0xff]
      %v255 = vld [vmem:[%s206 + $0xd0] sm:$0xff]
      %v256 = vld [vmem:[%s206 + $0xd8] sm:$0xff]
      %v257 = vld [vmem:[%s206 + $0xe0] sm:$0xff]
      %v258 = vld [vmem:[%s206 + $0xe8] sm:$0xff]
      %v259 = vld [vmem:[%s206 + $0xf0] sm:$0xff]
      %v260 = vld [vmem:[%s206 + $0xf8] sm:$0xff]
      %v261 = vld [vmem:[%s213] sm:$0xff]
      %v262 = vld [vmem:[%s213 + $0x8] sm:$0xff]
      %v263 = vld [vmem:[%s213 + $0x10] sm:$0xff]
      %v264 = vld [vmem:[%s213 + $0x18] sm:$0xff]
      %v265 = vld [vmem:[%s213 + $0x20] sm:$0xff]
      %v266 = vld [vmem:[%s213 + $0x28] sm:$0xff]
      %v267 = vld [vmem:[%s213 + $0x30] sm:$0xff]
      %v268 = vld [vmem:[%s213 + $0x38] sm:$0xff]
      %v269 = vld [vmem:[%s213 + $0x40] sm:$0xff]
      %v270 = vld [vmem:[%s213 + $0x48] sm:$0xff]
      %v271 = vld [vmem:[%s213 + $0x50] sm:$0xff]
      %v272 = vld [vmem:[%s213 + $0x58] sm:$0xff]
      %v273 = vld [vmem:[%s213 + $0x60] sm:$0xff]
      %v274 = vld [vmem:[%s213 + $0x68] sm:$0xff]
      %v275 = vld [vmem:[%s213 + $0x70] sm:$0xff]
      %v276 = vld [vmem:[%s213 + $0x78] sm:$0xff]
      %v277 = vld [vmem:[%s213 + $0x80] sm:$0xff]
      %v278 = vld [vmem:[%s213 + $0x88] sm:$0xff]
      %v279 = vld [vmem:[%s213 + $0x90] sm:$0xff]
      %v280 = vld [vmem:[%s213 + $0x98] sm:$0xff]
      %v281 = vld [vmem:[%s213 + $0xa0] sm:$0xff]
      %v282 = vld [vmem:[%s213 + $0xa8] sm:$0xff]
      %v283 = vld [vmem:[%s213 + $0xb0] sm:$0xff]
      %v284 = vld [vmem:[%s213 + $0xb8] sm:$0xff]
      %v285 = vld [vmem:[%s213 + $0xc0] sm:$0xff]
      %v286 = vld [vmem:[%s213 + $0xc8] sm:$0xff]
      %v287 = vld [vmem:[%s213 + $0xd0] sm:$0xff]
      %v288 = vld [vmem:[%s213 + $0xd8] sm:$0xff]
      %v289 = vld [vmem:[%s213 + $0xe0] sm:$0xff]
      %v290 = vld [vmem:[%s213 + $0xe8] sm:$0xff]
      %v291 = vld [vmem:[%s213 + $0xf0] sm:$0xff]
      %v292 = vld [vmem:[%s213 + $0xf8] sm:$0xff]
      %v293 = vsub.f32 %v229, %v261
      %v294 = vsub.f32 %v230, %v262
      %v295 = vsub.f32 %v231, %v263
      %v296 = vsub.f32 %v232, %v264
      %v297 = vsub.f32 %v233, %v265
      %v298 = vsub.f32 %v234, %v266
      %v299 = vsub.f32 %v235, %v267
      %v300 = vsub.f32 %v236, %v268
      %v301 = vsub.f32 %v237, %v269
      %v302 = vsub.f32 %v238, %v270
      %v303 = vsub.f32 %v239, %v271
      %v304 = vsub.f32 %v240, %v272
      %v305 = vsub.f32 %v241, %v273
      %v306 = vsub.f32 %v242, %v274
      %v307 = vsub.f32 %v243, %v275
      %v308 = vsub.f32 %v244, %v276
      %v309 = vsub.f32 %v245, %v277
      %v310 = vsub.f32 %v246, %v278
      %v311 = vsub.f32 %v247, %v279
      %v312 = vsub.f32 %v248, %v280
      %v313 = vsub.f32 %v249, %v281
      %v314 = vsub.f32 %v250, %v282
      %v315 = vsub.f32 %v251, %v283
      %v316 = vsub.f32 %v252, %v284
      %v317 = vsub.f32 %v253, %v285
      %v318 = vsub.f32 %v254, %v286
      %v319 = vsub.f32 %v255, %v287
      %v320 = vsub.f32 %v256, %v288
      %v321 = vsub.f32 %v257, %v289
      %v322 = vsub.f32 %v258, %v290
      %v323 = vsub.f32 %v259, %v291
      %v324 = vsub.f32 %v260, %v292
      %v325 = vld [vmem:[%s220] sm:$0xff]
      %v326 = vld [vmem:[%s220 + $0x8] sm:$0xff]
      %v327 = vld [vmem:[%s220 + $0x10] sm:$0xff]
      %v328 = vld [vmem:[%s220 + $0x18] sm:$0xff]
      %v329 = vld [vmem:[%s220 + $0x20] sm:$0xff]
      %v330 = vld [vmem:[%s220 + $0x28] sm:$0xff]
      %v331 = vld [vmem:[%s220 + $0x30] sm:$0xff]
      %v332 = vld [vmem:[%s220 + $0x38] sm:$0xff]
      %v333 = vld [vmem:[%s220 + $0x40] sm:$0xff]
      %v334 = vld [vmem:[%s220 + $0x48] sm:$0xff]
      %v335 = vld [vmem:[%s220 + $0x50] sm:$0xff]
      %v336 = vld [vmem:[%s220 + $0x58] sm:$0xff]
      %v337 = vld [vmem:[%s220 + $0x60] sm:$0xff]
      %v338 = vld [vmem:[%s220 + $0x68] sm:$0xff]
      %v339 = vld [vmem:[%s220 + $0x70] sm:$0xff]
      %v340 = vld [vmem:[%s220 + $0x78] sm:$0xff]
      %v341 = vld [vmem:[%s220 + $0x80] sm:$0xff]
      %v342 = vld [vmem:[%s220 + $0x88] sm:$0xff]
      %v343 = vld [vmem:[%s220 + $0x90] sm:$0xff]
      %v344 = vld [vmem:[%s220 + $0x98] sm:$0xff]
      %v345 = vld [vmem:[%s220 + $0xa0] sm:$0xff]
      %v346 = vld [vmem:[%s220 + $0xa8] sm:$0xff]
      %v347 = vld [vmem:[%s220 + $0xb0] sm:$0xff]
      %v348 = vld [vmem:[%s220 + $0xb8] sm:$0xff]
      %v349 = vld [vmem:[%s220 + $0xc0] sm:$0xff]
      %v350 = vld [vmem:[%s220 + $0xc8] sm:$0xff]
      %v351 = vld [vmem:[%s220 + $0xd0] sm:$0xff]
      %v352 = vld [vmem:[%s220 + $0xd8] sm:$0xff]
      %v353 = vld [vmem:[%s220 + $0xe0] sm:$0xff]
      %v354 = vld [vmem:[%s220 + $0xe8] sm:$0xff]
      %v355 = vld [vmem:[%s220 + $0xf0] sm:$0xff]
      %v356 = vld [vmem:[%s220 + $0xf8] sm:$0xff]
      %vm357 = vcmp.ne.s32.totalorder %v325, 0
      %vm358 = vcmp.ne.s32.totalorder %v326, 0
      %vm359 = vcmp.ne.s32.totalorder %v327, 0
      %vm360 = vcmp.ne.s32.totalorder %v328, 0
      %vm361 = vcmp.ne.s32.totalorder %v329, 0
      %vm362 = vcmp.ne.s32.totalorder %v330, 0
      %vm363 = vcmp.ne.s32.totalorder %v331, 0
      %vm364 = vcmp.ne.s32.totalorder %v332, 0
      %vm365 = vcmp.ne.s32.totalorder %v333, 0
      %vm366 = vcmp.ne.s32.totalorder %v334, 0
      %vm367 = vcmp.ne.s32.totalorder %v335, 0
      %vm368 = vcmp.ne.s32.totalorder %v336, 0
      %vm369 = vcmp.ne.s32.totalorder %v337, 0
      %vm370 = vcmp.ne.s32.totalorder %v338, 0
      %vm371 = vcmp.ne.s32.totalorder %v339, 0
      %vm372 = vcmp.ne.s32.totalorder %v340, 0
      %vm373 = vcmp.ne.s32.totalorder %v341, 0
      %vm374 = vcmp.ne.s32.totalorder %v342, 0
      %vm375 = vcmp.ne.s32.totalorder %v343, 0
      %vm376 = vcmp.ne.s32.totalorder %v344, 0
      %vm377 = vcmp.ne.s32.totalorder %v345, 0
      %vm378 = vcmp.ne.s32.totalorder %v346, 0
      %vm379 = vcmp.ne.s32.totalorder %v347, 0
      %vm380 = vcmp.ne.s32.totalorder %v348, 0
      %vm381 = vcmp.ne.s32.totalorder %v349, 0
      %vm382 = vcmp.ne.s32.totalorder %v350, 0
      %vm383 = vcmp.ne.s32.totalorder %v351, 0
      %vm384 = vcmp.ne.s32.totalorder %v352, 0
      %vm385 = vcmp.ne.s32.totalorder %v353, 0
      %vm386 = vcmp.ne.s32.totalorder %v354, 0
      %vm387 = vcmp.ne.s32.totalorder %v355, 0
      %vm388 = vcmp.ne.s32.totalorder %v356, 0
      %v389 = vmul.f32 %v293, %v293
      %v390 = vmul.f32 %v294, %v294
      %v391 = vmul.f32 %v295, %v295
      %v392 = vmul.f32 %v296, %v296
      %v393 = vmul.f32 %v297, %v297
      %v394 = vmul.f32 %v298, %v298
      %v395 = vmul.f32 %v299, %v299
      %v396 = vmul.f32 %v300, %v300
      %v397 = vmul.f32 %v301, %v301
      %v398 = vmul.f32 %v302, %v302
      %v399 = vmul.f32 %v303, %v303
      %v400 = vmul.f32 %v304, %v304
      %v401 = vmul.f32 %v305, %v305
      %v402 = vmul.f32 %v306, %v306
      %v403 = vmul.f32 %v307, %v307
      %v404 = vmul.f32 %v308, %v308
      %v405 = vmul.f32 %v309, %v309
      %v406 = vmul.f32 %v310, %v310
      %v407 = vmul.f32 %v311, %v311
      %v408 = vmul.f32 %v312, %v312
      %v409 = vmul.f32 %v313, %v313
      %v410 = vmul.f32 %v314, %v314
      %v411 = vmul.f32 %v315, %v315
      %v412 = vmul.f32 %v316, %v316
      %v413 = vmul.f32 %v317, %v317
      %v414 = vmul.f32 %v318, %v318
      %v415 = vmul.f32 %v319, %v319
      %v416 = vmul.f32 %v320, %v320
      %v417 = vmul.f32 %v321, %v321
      %v418 = vmul.f32 %v322, %v322
      %v419 = vmul.f32 %v323, %v323
      %v420 = vmul.f32 %v324, %v324
      %v421 = vsel %vm357, %v389, 0.0
      %v422 = vsel %vm358, %v390, 0.0
      %v423 = vsel %vm359, %v391, 0.0
      %v424 = vsel %vm360, %v392, 0.0
      %v425 = vsel %vm361, %v393, 0.0
      %v426 = vsel %vm362, %v394, 0.0
      %v427 = vsel %vm363, %v395, 0.0
      %v428 = vsel %vm364, %v396, 0.0
      %v429 = vsel %vm365, %v397, 0.0
      %v430 = vsel %vm366, %v398, 0.0
      %v431 = vsel %vm367, %v399, 0.0
      %v432 = vsel %vm368, %v400, 0.0
      %v433 = vsel %vm369, %v401, 0.0
      %v434 = vsel %vm370, %v402, 0.0
      %v435 = vsel %vm371, %v403, 0.0
      %v436 = vsel %vm372, %v404, 0.0
      %v437 = vsel %vm373, %v405, 0.0
      %v438 = vsel %vm374, %v406, 0.0
      %v439 = vsel %vm375, %v407, 0.0
      %v440 = vsel %vm376, %v408, 0.0
      %v441 = vsel %vm377, %v409, 0.0
      %v442 = vsel %vm378, %v410, 0.0
      %v443 = vsel %vm379, %v411, 0.0
      %v444 = vsel %vm380, %v412, 0.0
      %v445 = vsel %vm381, %v413, 0.0
      %v446 = vsel %vm382, %v414, 0.0
      %v447 = vsel %vm383, %v415, 0.0
      %v448 = vsel %vm384, %v416, 0.0
      %v449 = vsel %vm385, %v417, 0.0
      %v450 = vsel %vm386, %v418, 0.0
      %v451 = vsel %vm387, %v419, 0.0
      %v452 = vsel %vm388, %v420, 0.0
      %v453 = vsel %vm357, 1.0, 0.0
      %v454 = vsel %vm358, 1.0, 0.0
      %v455 = vsel %vm359, 1.0, 0.0
      %v456 = vsel %vm360, 1.0, 0.0
      %v457 = vsel %vm361, 1.0, 0.0
      %v458 = vsel %vm362, 1.0, 0.0
      %v459 = vsel %vm363, 1.0, 0.0
      %v460 = vsel %vm364, 1.0, 0.0
      %v461 = vsel %vm365, 1.0, 0.0
      %v462 = vsel %vm366, 1.0, 0.0
      %v463 = vsel %vm367, 1.0, 0.0
      %v464 = vsel %vm368, 1.0, 0.0
      %v465 = vsel %vm369, 1.0, 0.0
      %v466 = vsel %vm370, 1.0, 0.0
      %v467 = vsel %vm371, 1.0, 0.0
      %v468 = vsel %vm372, 1.0, 0.0
      %v469 = vsel %vm373, 1.0, 0.0
      %v470 = vsel %vm374, 1.0, 0.0
      %v471 = vsel %vm375, 1.0, 0.0
      %v472 = vsel %vm376, 1.0, 0.0
      %v473 = vsel %vm377, 1.0, 0.0
      %v474 = vsel %vm378, 1.0, 0.0
      %v475 = vsel %vm379, 1.0, 0.0
      %v476 = vsel %vm380, 1.0, 0.0
      %v477 = vsel %vm381, 1.0, 0.0
      %v478 = vsel %vm382, 1.0, 0.0
      %v479 = vsel %vm383, 1.0, 0.0
      %v480 = vsel %vm384, 1.0, 0.0
      %v481 = vsel %vm385, 1.0, 0.0
      %v482 = vsel %vm386, 1.0, 0.0
      %v483 = vsel %vm387, 1.0, 0.0
      %v484 = vsel %vm388, 1.0, 0.0
      %v485 = vadd.f32 %v421, %v425
      %v486 = vadd.f32 %v485, %v429
      %v487 = vadd.f32 %v486, %v433
      %v488 = vadd.f32 %v487, %v437
      %v489 = vadd.f32 %v488, %v441
      %v490 = vadd.f32 %v489, %v445
      %v491 = vadd.f32 %v490, %v449
      %v492 = vadd.f32 %v422, %v426
      %v493 = vadd.f32 %v492, %v430
      %v494 = vadd.f32 %v493, %v434
      %v495 = vadd.f32 %v494, %v438
      %v496 = vadd.f32 %v495, %v442
      %v497 = vadd.f32 %v496, %v446
      %v498 = vadd.f32 %v497, %v450
      %v499 = vadd.f32 %v423, %v427
      %v500 = vadd.f32 %v499, %v431
      %v501 = vadd.f32 %v500, %v435
      %v502 = vadd.f32 %v501, %v439
      %v503 = vadd.f32 %v502, %v443
      %v504 = vadd.f32 %v503, %v447
      %v505 = vadd.f32 %v504, %v451
      %v506 = vadd.f32 %v424, %v428
      %v507 = vadd.f32 %v506, %v432
      %v508 = vadd.f32 %v507, %v436
      %v509 = vadd.f32 %v508, %v440
      %v510 = vadd.f32 %v509, %v444
      %v511 = vadd.f32 %v510, %v448
      %v512 = vadd.f32 %v511, %v452
      %513 = vst [vmem:[%s227] sm:$0xff] %v491
      %514 = vst [vmem:[%s227 + $0x8] sm:$0xff] %v498
      %515 = vst [vmem:[%s227 + $0x10] sm:$0xff] %v505
      %516 = vst [vmem:[%s227 + $0x18] sm:$0xff] %v512
      %v517 = vadd.f32 %v453, %v457
      %v518 = vadd.f32 %v517, %v461
      %v519 = vadd.f32 %v518, %v465
      %v520 = vadd.f32 %v519, %v469
      %v521 = vadd.f32 %v520, %v473
      %v522 = vadd.f32 %v521, %v477
      %v523 = vadd.f32 %v522, %v481
      %v524 = vadd.f32 %v454, %v458
      %v525 = vadd.f32 %v524, %v462
      %v526 = vadd.f32 %v525, %v466
      %v527 = vadd.f32 %v526, %v470
      %v528 = vadd.f32 %v527, %v474
      %v529 = vadd.f32 %v528, %v478
      %v530 = vadd.f32 %v529, %v482
      %v531 = vadd.f32 %v455, %v459
      %v532 = vadd.f32 %v531, %v463
      %v533 = vadd.f32 %v532, %v467
      %v534 = vadd.f32 %v533, %v471
      %v535 = vadd.f32 %v534, %v475
      %v536 = vadd.f32 %v535, %v479
      %v537 = vadd.f32 %v536, %v483
      %v538 = vadd.f32 %v456, %v460
      %v539 = vadd.f32 %v538, %v464
      %v540 = vadd.f32 %v539, %v468
      %v541 = vadd.f32 %v540, %v472
      %v542 = vadd.f32 %v541, %v476
      %v543 = vadd.f32 %v542, %v480
      %v544 = vadd.f32 %v543, %v484
      %545 = vst [vmem:[%s227 + $0x20] sm:$0xff] %v523
      %546 = vst [vmem:[%s227 + $0x28] sm:$0xff] %v530
      %547 = vst [vmem:[%s227 + $0x30] sm:$0xff] %v537
      %548 = vst [vmem:[%s227 + $0x38] sm:$0xff] %v544
      %s549 = smul.u32 2, %s14
      %p550 = scmp.lt.s32.totalorder %s549, 3
      %s551 = scalar_select %p550, %s549, 3
      %s552 = smul.addr %s551, 4
      %s553 = smul.addr %s552, 8
      %s554 = scalar_lea.vmem %s3, %s553
      // Predicated region
      $region33: #{masked_mse_loss.1} parent=31 // pred_check
        %p555 = pneg %p110
      $region34: #{masked_mse_loss.1} parent=31 // pred_check_branch
        %557 = sbr.rel (%p555) target = $region36
      $region35: #{masked_mse_loss.1} parent=31 // pred_region
        %s558 = smul.u32 2, %s14
      $region36: #{masked_mse_loss.1} parent=31 // pred_fallthru
        _
    $region32: #{masked_mse_loss.1} parent=5 // pred_fallthru
      _
    %p559 = scmp.le.s32.totalorder 2, %s9
    // Predicated region
    $region37: #{masked_mse_loss.1} parent=5 // pred_check
      %p560 = pneg %p559
    $region38: #{masked_mse_loss.1} parent=5 // pred_check_branch
      %562 = sbr.rel (%p560) target = $region40
    $region39: #{masked_mse_loss.1} parent=5 // pred_region
      %s563 = ssub.s32 %s9, 2
      // Predicated region
      $region41: #{masked_mse_loss.1} parent=39 // pred_check
        %p564 = pneg %p116
      $region42: #{masked_mse_loss.1} parent=39 // pred_check_branch
        %566 = sbr.rel (%p564) target = $region44
      $region43: #{masked_mse_loss.1} parent=39 // pred_region
        %s567 = smul.u32 2, %s15
        %p568 = scmp.lt.s32.totalorder %s567, 3
        %s569 = scalar_select %p568, %s567, 3
        %s570 = smul.addr %s569, 4
        %s571 = smul.addr %s570, 8
        %s572 = scalar_lea.vmem %s3, %s571
      $region44: #{masked_mse_loss.1} parent=39 // pred_fallthru
        _
    $region40: #{masked_mse_loss.1} parent=5 // pred_fallthru
      _
  $region6: #{masked_mse_loss.1} parent=0 // loop_footer
    %s13 = sadd.s32 1, %s9
  $region7: #{masked_mse_loss.1} parent=0 // loop_footer_branch
    %8 = sbr.rel target = $region3
  $region8: #{masked_mse_loss.1} parent=0 // loop_exit
    _

</llo_original>
